<compile_context>
chip_gen: v6e
topology: v6e:2x2x1
jax: 0.10.0
libtpu: 0.0.40
codegen_flags: <defaults>
</compile_context>

<pallas_src>
import jax
import jax.numpy as jnp
from jax.experimental import pallas as pl
from jax.experimental.pallas import tpu as pltpu

_MIB = 1024 * 1024


def _round_up(x: int, m: int) -> int:
    return ((x + m - 1) // m) * m


# ------------------------------ kernels -------------------------------------


def _make_resident_kernel(compute_dtype):
    # Whole (padded) W and bias are resident in VMEM; single dot per M tile.
    def kernel(x_ref, w_ref, b_ref, o_ref):
        x = x_ref[...]
        w = w_ref[...]
        if compute_dtype is not None:
            x = x.astype(compute_dtype)
            w = w.astype(compute_dtype)
        acc = jnp.dot(x, w, preferred_element_type=jnp.float32)  # MXU, f32 acc
        o_ref[...] = (acc + b_ref[...].astype(jnp.float32)).astype(o_ref.dtype)

    return kernel


def _make_tiled_kernel_f32out(compute_dtype):
    # f32 output: accumulate directly into the (K-invariant) output block.
    # No scratch, no finalize copy -> frees the vst slot + VMEM on v5e.
    def kernel(x_ref, w_ref, b_ref, o_ref):
        k = pl.program_id(2)

        @pl.when(k == 0)
        def _init():
            o_ref[...] = jnp.zeros_like(o_ref)

        x = x_ref[...]
        w = w_ref[...]
        if compute_dtype is not None:
            x = x.astype(compute_dtype)
            w = w.astype(compute_dtype)
        o_ref[...] += jnp.dot(x, w, preferred_element_type=jnp.float32)

        @pl.when(k == pl.num_programs(2) - 1)
        def _finalize():
            o_ref[...] += b_ref[...]          # bias added exactly once

    return kernel


def _make_tiled_kernel_acc(compute_dtype):
    # Non-f32 output: keep an f32 VMEM accumulator, cast once in the epilogue.
    def kernel(x_ref, w_ref, b_ref, o_ref, acc_ref):
        k = pl.program_id(2)

        @pl.when(k == 0)
        def _init():
            acc_ref[...] = jnp.zeros_like(acc_ref)

        x = x_ref[...]
        w = w_ref[...]
        if compute_dtype is not None:
            x = x.astype(compute_dtype)
            w = w.astype(compute_dtype)
        acc_ref[...] += jnp.dot(x, w, preferred_element_type=jnp.float32)

        @pl.when(k == pl.num_programs(2) - 1)
        def _finalize():
            o_ref[...] = (acc_ref[...]
                          + b_ref[...].astype(jnp.float32)).astype(o_ref.dtype)

    return kernel


# ------------------------------ wrapper -------------------------------------


def pad_transfusion_params(weight, bias):
    """Pad W/bias to lane-aligned (multiple-of-128) dims.

    Call this ONCE at init (parameters are static), so the per-call forward
    never re-copies W/bias through HBM just to pad them.
    """
    k, n = weight.shape
    k_p, n_p = _round_up(k, 128), _round_up(n, 128)
    if (k_p, n_p) != (k, n):
        weight = jnp.pad(weight, ((0, k_p - k), (0, n_p - n)))
    if bias.shape[0] != n_p:
        bias = jnp.pad(bias, (0, n_p - bias.shape[0]))
    return weight, bias


def etp_transfusion_head(source_embedding, weight, bias, *,
                         out_dim=None,
                         tm: int = 512, tk: int = 1024, tn: int = 512,
                         compute_dtype=None,
                         resident_w_bytes: int = 8 * _MIB,
                         vmem_budget_bytes: int = 40 * _MIB,
                         vmem_limit_bytes=None):
    """y = source_embedding @ weight + bias  (Pallas TPU matmul).

    source_embedding: [B, source_embedding_dim]
    weight:           [source_embedding_dim(_padded), wubu_tangent_dim(_padded)]
    bias:             [wubu_tangent_dim(_padded)]
    out_dim:          original wubu_tangent_dim (needed if params were
                      pre-padded via pad_transfusion_params)
    returns:          [B, out_dim]
    """
    B, d_in = source_embedding.shape
    k_w, n_w = weight.shape
    assert k_w >= d_in, "embedding dim mismatch"
    d_out = n_w if out_dim is None else out_dim
    assert d_out <= n_w, "out_dim larger than weight's output dim"

    # No-op if the caller already padded at init.
    weight, bias = pad_transfusion_params(weight, bias)
    k_p, n_p = weight.shape
    bias2 = bias.reshape(1, n_p)

    x_item = jnp.dtype(source_embedding.dtype).itemsize
    w_item = jnp.dtype(weight.dtype).itemsize
    b_item = jnp.dtype(bias.dtype).itemsize
    o_dtype = source_embedding.dtype
    o_item = jnp.dtype(o_dtype).itemsize

    w_total_bytes = k_p * n_p * w_item + n_p * b_item
    resident = w_total_bytes <= resident_w_bytes

    if resident:
        # ---------------- resident-W path: grid = (M blocks,) ----------------
        # Double-buffered x + out tiles per M step; W/bias loaded once.
        per_row = 2 * (k_p * x_item + n_p * o_item)
        avail = max(vmem_budget_bytes - 2 * w_total_bytes, 8 * per_row)
        tm_cap = max(8, (avail // per_row) // 8 * 8)
        tm_e = min(tm, _round_up(B, 8), tm_cap)
        # Keep >=2 M blocks when possible so both v7x TensorCores get work.
        if B > 8 and _round_up(B, tm_e) // tm_e < 2:
            tm_e = min(tm_e, max(8, _round_up((B + 1) // 2, 8)))
        m_p = _round_up(B, tm_e)
        grid_m = m_p // tm_e

        x_p = source_embedding
        if (m_p, k_p) != (B, d_in):
            x_p = jnp.pad(source_embedding, ((0, m_p - B), (0, k_p - d_in)))

        if vmem_limit_bytes is None:
            vmem_limit = min(48 * _MIB,
                             2 * w_total_bytes + tm_e * per_row + 4 * _MIB)
        else:
            vmem_limit = vmem_limit_bytes

        cost = pl.CostEstimate(
            flops=2 * m_p * n_p * k_p,
            transcendentals=0,
            bytes_accessed=(m_p * k_p * x_item + k_p * n_p * w_item
                            + n_p * b_item + m_p * n_p * o_item),
        )

        out_p = pl.pallas_call(
            _make_resident_kernel(compute_dtype),
            out_shape=jax.ShapeDtypeStruct((m_p, n_p), o_dtype),
            grid=(grid_m,),
            in_specs=[
                pl.BlockSpec((tm_e, k_p), lambda i: (i, 0)),   # x: streamed
                pl.BlockSpec((k_p, n_p), lambda i: (0, 0)),    # W: resident
                pl.BlockSpec((1, n_p), lambda i: (0, 0)),      # bias: resident
            ],
            out_specs=pl.BlockSpec((tm_e, n_p), lambda i: (i, 0)),
            compiler_params=pltpu.CompilerParams(
                dimension_semantics=("parallel",),
                vmem_limit_bytes=vmem_limit,
            ),
            cost_estimate=cost,
        )(x_p, weight, bias2)

    else:
        # ---------------- tiled fallback: grid = (M, N, K) --------------------
        tm_e = min(tm, _round_up(B, 8))
        tk_e = min(tk, k_p)
        tn_e = min(tn, n_p)

        def _ws(tm_, tk_, tn_):
            ws = 2 * (tm_ * tk_ * x_item + tk_ * tn_ * w_item + tn_ * b_item)
            ws += 2 * tm_ * tn_ * o_item
            if o_dtype != jnp.float32:
                ws += tm_ * tn_ * 4          # f32 scratch accumulator
            return ws

        # Shrink tiles until the double-buffered working set fits the budget.
        while (_ws(tm_e, tk_e, tn_e) > vmem_budget_bytes
               and (tk_e > 128 or tn_e > 128 or tm_e > 8)):
            if tk_e > 128:
                tk_e = max(128, tk_e // 2)
            elif tn_e > 128:
                tn_e = max(128, tn_e // 2)
            else:
                tm_e = max(8, tm_e // 2)

        m_p = _round_up(B, tm_e)
        k_p2 = _round_up(k_p, tk_e)
        n_p2 = _round_up(n_p, tn_e)
        if (k_p2, n_p2) != (k_p, n_p):          # only if tiles don't divide
            weight = jnp.pad(weight, ((0, k_p2 - k_p), (0, n_p2 - n_p)))
            bias2 = jnp.pad(bias2, ((0, 0), (0, n_p2 - n_p)))
        k_p, n_p = k_p2, n_p2

        x_p = source_embedding
        if (m_p, k_p) != (B, d_in):
            x_p = jnp.pad(source_embedding, ((0, m_p - B), (0, k_p - d_in)))

        grid = (m_p // tm_e, n_p // tn_e, k_p // tk_e)

        if vmem_limit_bytes is None:
            vmem_limit = min(48 * _MIB, _ws(tm_e, tk_e, tn_e) + 4 * _MIB)
        else:
            vmem_limit = vmem_limit_bytes

        # bytes_accessed reflects re-streaming of x (per N block) and W (per M
        # block) plus output writeback.
        cost = pl.CostEstimate(
            flops=2 * m_p * n_p * k_p,
            transcendentals=0,
            bytes_accessed=(m_p * k_p * grid[1] * x_item
                            + k_p * n_p * grid[0] * w_item
                            + n_p * grid[0] * b_item
                            + m_p * n_p * o_item),
        )

        if o_dtype == jnp.float32:
            kernel = _make_tiled_kernel_f32out(compute_dtype)
            scratch = []
        else:
            kernel = _make_tiled_kernel_acc(compute_dtype)
            scratch = [pltpu.VMEM((tm_e, tn_e), jnp.float32)]

        out_p = pl.pallas_call(
            kernel,
            out_shape=jax.ShapeDtypeStruct((m_p, n_p), o_dtype),
            grid=grid,
            in_specs=[
                pl.BlockSpec((tm_e, tk_e), lambda i, j, k: (i, k)),   # x tile
                pl.BlockSpec((tk_e, tn_e), lambda i, j, k: (k, j)),   # W tile
                pl.BlockSpec((1, tn_e), lambda i, j, k: (0, j)),      # bias
            ],
            out_specs=pl.BlockSpec((tm_e, tn_e), lambda i, j, k: (i, j)),
            scratch_shapes=scratch,
            compiler_params=pltpu.CompilerParams(
                dimension_semantics=("parallel", "parallel", "arbitrary"),
                vmem_limit_bytes=vmem_limit,
            ),
            cost_estimate=cost,
        )(x_p, weight, bias2)

    if out_p.shape != (B, d_out):
        out_p = out_p[:B, :d_out]
    return out_p


if __name__ == "__main__":
    # Small, deterministic example consistent with the module's __init__ args.
    source_embedding_dim = 32
    wubu_tangent_dim = 64
    batch = 8

    key = jax.random.PRNGKey(0)
    kx, kw, kb = jax.random.split(key, 3)

    x = jax.random.normal(kx, (batch, source_embedding_dim), dtype=jnp.float32)
    w_scale = 1.0 / jnp.sqrt(jnp.float32(source_embedding_dim))
    weight = jax.random.uniform(
        kw, (source_embedding_dim, wubu_tangent_dim),
        minval=-w_scale, maxval=w_scale, dtype=jnp.float32)
    bias = jax.random.uniform(
        kb, (wubu_tangent_dim,),
        minval=-w_scale, maxval=w_scale, dtype=jnp.float32)

    # Pad the static parameters ONCE at "init" (per perf review) so the
    # forward never re-pads them.
    weight_p, bias_p = pad_transfusion_params(weight, bias)

    out = etp_transfusion_head(x, weight_p, bias_p, out_dim=wubu_tangent_dim)
    out = jax.block_until_ready(out)

    # Correctness check against plain-JAX reference.
    ref = x @ weight + bias[None, :]
    assert out.shape == (batch, wubu_tangent_dim)
    assert jnp.allclose(out, ref, atol=1e-5, rtol=1e-5)

    print("KERNEL_OK")
</pallas_src>

<mosaic_0001>
module attributes {stable_mosaic.version = 11 : i64} {
  func.func @kernel(%arg0: i32, %arg1: memref<8x128xf32, #tpu.memory_space<vmem>>, %arg2: memref<128x128xf32, #tpu.memory_space<vmem>>, %arg3: memref<1x128xf32, #tpu.memory_space<vmem>>, %arg4: memref<8x128xf32, #tpu.memory_space<vmem>>) attributes {dimension_semantics = [#tpu.dimension_semantics<parallel>], iteration_bounds = array<i64: 1>, scalar_prefetch = 0 : i64, scratch_operands = 0 : i64, tpu.core_type = #tpu.core_type<tc>, window_params = [{transform_indices = @transform_0, window_bounds = array<i64: 8, 128>}, {pipeline_mode = #tpu.pipeline_mode<synchronous>, transform_indices = @transform_1, window_bounds = array<i64: 128, 128>}, {pipeline_mode = #tpu.pipeline_mode<synchronous>, transform_indices = @transform_2, window_bounds = array<i64: 1, 128>}, {transform_indices = @transform_3, window_bounds = array<i64: 8, 128>}]} {
    %c0 = arith.constant 0 : index
    %c0_0 = arith.constant 0 : index
    %0 = vector.load %arg1[%c0, %c0_0] : memref<8x128xf32, #tpu.memory_space<vmem>>, vector<8x128xf32>
    %c0_1 = arith.constant 0 : index
    %c0_2 = arith.constant 0 : index
    %1 = vector.load %arg2[%c0_1, %c0_2] : memref<128x128xf32, #tpu.memory_space<vmem>>, vector<128x128xf32>
    %cst = arith.constant dense<0.000000e+00> : vector<8x128xf32>
    %2 = tpu.matmul %0, %1, %cst {dimension_numbers = #tpu.dot_dimension_numbers<[1], [0], [0], [1], [0, 0, 1, 1], [], []>} : vector<8x128xf32>, vector<128x128xf32>, vector<8x128xf32> -> vector<8x128xf32>
    %c0_3 = arith.constant 0 : index
    %c0_4 = arith.constant 0 : index
    %3 = vector.load %arg3[%c0_3, %c0_4] : memref<1x128xf32, #tpu.memory_space<vmem>>, vector<1x128xf32>
    %4 = vector.broadcast %3 : vector<1x128xf32> to vector<8x128xf32>
    %5 = arith.addf %2, %4 : vector<8x128xf32>
    %c0_5 = arith.constant 0 : index
    %c0_6 = arith.constant 0 : index
    %6 = vector.load %arg4[%c0_5, %c0_6] : memref<8x128xf32, #tpu.memory_space<vmem>>, vector<8x128xf32>
    tpu.vector_store %arg4[%c0_5, %c0_6], %5 {strides = array<i32>} : memref<8x128xf32, #tpu.memory_space<vmem>>, vector<8x128xf32>,
    return
  }
  func.func @transform_0(%arg0: i32) -> (i32, i32) {
    %c0_i32 = arith.constant 0 : i32
    %c0_i32_0 = arith.constant 0 : i32
    return %arg0, %c0_i32 : i32, i32
  }
  func.func @transform_1(%arg0: i32) -> (i32, i32) {
    %c0_i32 = arith.constant 0 : i32
    %c0_i32_0 = arith.constant 0 : i32
    %c0_i32_1 = arith.constant 0 : i32
    return %c0_i32, %c0_i32_0 : i32, i32
  }
  func.func @transform_2(%arg0: i32) -> (i32, i32) {
    %c0_i32 = arith.constant 0 : i32
    %c0_i32_0 = arith.constant 0 : i32
    %c0_i32_1 = arith.constant 0 : i32
    return %c0_i32, %c0_i32_0 : i32, i32
  }
  func.func @transform_3(%arg0: i32) -> (i32, i32) {
    %c0_i32 = arith.constant 0 : i32
    %c0_i32_0 = arith.constant 0 : i32
    return %arg0, %c0_i32 : i32, i32
  }
}

</mosaic_0001>

<llo_original>
// kernel: tpu_custom_call.1
$region0: #{tpu_custom_call.1}
  #allocation0 [shape = 'u32[]', space=smem, size = 0x4, offset = 0x4, fixed_abs, tag = 'smem constant byte address 0x4 - core index']
  #allocation1 [shape = 'u32[144,128]{1,0:T(1,128)}', space=vmem, size = 0x12000, scoped, tag = 'internal scratch']
  %s0 = inlined_call_operand.hbm [shape: f32[8,128], index: 0, kind: input, shape index: {}]
  %s1 = inlined_call_operand.hbm [shape: f32[128,128], index: 1, kind: input, shape index: {}]
  %s2 = inlined_call_operand.vmem [shape: f32[1,128], index: 2, kind: input, shape index: {}]
  %s3 = inlined_call_operand.hbm [shape: f32[8,128], index: 3, kind: output, shape index: {}]
  %s4 = sld [smem:[#allocation0]]
  $region30: #{tpu_custom_call.1} parent=0
    _
  %s6 = ssub.s32 1, %s4
  %s7 = scalar_select 0, %s6, %s4
  $region1: #{tpu_custom_call.1} parent=0
    #allocation2 [shape = 'u8[4096]{0}', space=vmem, size = 0x1000, scoped, tag = 'input window, operand 0, single buffered']
    #allocation3 [shape = 's32[1]{0}', space=sflag, size = 0x4, scoped, tag = 'scoped memory for tpu_custom_call.1']
    #allocation4 [shape = 's32[1]{0}', space=sflag, size = 0x4, scoped, tag = 'scoped memory for tpu_custom_call.1']
    #allocation5 [shape = 'u8[65536]{0}', space=vmem, size = 0x10000, scoped, tag = 'input window, operand 1, single buffered']
    #allocation6 [shape = 's32[1]{0}', space=sflag, size = 0x4, scoped, tag = 'scoped memory for tpu_custom_call.1']
    #allocation7 [shape = 'u8[4096]{0}', space=vmem, size = 0x1000, scoped, tag = 'output window, operand 0, single buffered']
    %8 = vsyncpa [#allocation3], 0
    %9 = vsyncpa [#allocation6], 0
    %10 = vsyncpa [#allocation4], 0
    // Predicated region
    $region2: #{tpu_custom_call.1} parent=1 // pred_check
      _
    $region3: #{tpu_custom_call.1} parent=1 // pred_check_branch
      %12 = sbr.rel (0) target = $region5
    $region4: #{tpu_custom_call.1} parent=1 // pred_region
      %s14 = ssub.s32 128, 128
      %15 = vsyncadd [#allocation3], %s14
      %s17 = sshll.u32 [#allocation2], 4
      %s18 = int_to_ptr.vmem [resolvable:$true] %s17
      %20 = dma.hbm_to_vmem [thread:$0]  %s0, 128, %s18, [#allocation3]
    $region5: #{tpu_custom_call.1} parent=1 // pred_fallthru
      _
    // Predicated region
    $region6: #{tpu_custom_call.1} parent=1 // pred_check
      _
    $region7: #{tpu_custom_call.1} parent=1 // pred_check_branch
      %22 = sbr.rel (0) target = $region9
    $region8: #{tpu_custom_call.1} parent=1 // pred_region
      %s24 = ssub.s32 2048, 2048
      %25 = vsyncadd [#allocation6], %s24
      %s26 = sshll.u32 [#allocation5], 4
      %s27 = int_to_ptr.vmem [resolvable:$true] %s26
      %32 = dma.hbm_to_vmem [thread:$0]  %s1, 2048, %s27, [#allocation6], 128, 128, 8
    $region9: #{tpu_custom_call.1} parent=1 // pred_fallthru
      _
    // Predicated region
    $region10: #{tpu_custom_call.1} parent=1 // pred_check
      _
    $region11: #{tpu_custom_call.1} parent=1 // pred_check_branch
      %34 = sbr.rel (0) target = $region13
    $region12: #{tpu_custom_call.1} parent=1 // pred_region
      _
    $region13: #{tpu_custom_call.1} parent=1 // pred_fallthru
      _
    // Predicated region
    $region14: #{tpu_custom_call.1} parent=1 // pred_check
      _
    $region15: #{tpu_custom_call.1} parent=1 // pred_check_branch
      %36 = sbr.rel (0) target = $region17
    $region16: #{tpu_custom_call.1} parent=1 // pred_region
      %37 = dma.done [#allocation3], 128
    $region17: #{tpu_custom_call.1} parent=1 // pred_fallthru
      _
    // Predicated region
    $region18: #{tpu_custom_call.1} parent=1 // pred_check
      _
    $region19: #{tpu_custom_call.1} parent=1 // pred_check_branch
      %39 = sbr.rel (0) target = $region21
    $region20: #{tpu_custom_call.1} parent=1 // pred_region
      %40 = dma.done [#allocation6], 2048
    $region21: #{tpu_custom_call.1} parent=1 // pred_fallthru
      _
    %v41 = vld [vmem:[#allocation2] sm:$0xff]
    %v42 = vld [vmem:[#allocation5] sm:$0xff]
    %v43 = vld [vmem:[#allocation5 + $0x8] sm:$0xff]
    %v44 = vld [vmem:[#allocation5 + $0x10] sm:$0xff]
    %v45 = vld [vmem:[#allocation5 + $0x18] sm:$0xff]
    %v46 = vld [vmem:[#allocation5 + $0x20] sm:$0xff]
    %v47 = vld [vmem:[#allocation5 + $0x28] sm:$0xff]
    %v48 = vld [vmem:[#allocation5 + $0x30] sm:$0xff]
    %v49 = vld [vmem:[#allocation5 + $0x38] sm:$0xff]
    %v50 = vld [vmem:[#allocation5 + $0x40] sm:$0xff]
    %v51 = vld [vmem:[#allocation5 + $0x48] sm:$0xff]
    %v52 = vld [vmem:[#allocation5 + $0x50] sm:$0xff]
    %v53 = vld [vmem:[#allocation5 + $0x58] sm:$0xff]
    %v54 = vld [vmem:[#allocation5 + $0x60] sm:$0xff]
    %v55 = vld [vmem:[#allocation5 + $0x68] sm:$0xff]
    %v56 = vld [vmem:[#allocation5 + $0x70] sm:$0xff]
    %v57 = vld [vmem:[#allocation5 + $0x78] sm:$0xff]
    %v58 = vld [vmem:[%s2] sm:$0x1]
    %v60 = vlaneseq
    %v61 = vshrl.u32 %v60, 7
    %v62 = vsub.s32 0, %v61
    %v63 = vrot.slane %v58, %v62
    %65 = vmatprep.subr.mxu0 0.0
    %66 = vmatpush1.msra.mxu0 %v57
    %67 = vmatprep.subr.mxu0 0.0
    %68 = vmatpush1.msra.mxu0 %v56
    %69 = vmatprep.subr.mxu0 0.0
    %70 = vmatpush1.msra.mxu0 %v55
    %71 = vmatprep.subr.mxu0 0.0
    %72 = vmatpush1.msra.mxu0 %v54
    %73 = vmatprep.subr.mxu0 0.0
    %74 = vmatpush1.msra.mxu0 %v53
    %75 = vmatprep.subr.mxu0 0.0
    %76 = vmatpush1.msra.mxu0 %v52
    %77 = vmatprep.subr.mxu0 0.0
    %78 = vmatpush1.msra.mxu0 %v51
    %79 = vmatprep.subr.mxu0 0.0
    %80 = vmatpush1.msra.mxu0 %v50
    %81 = vmatprep.subr.mxu0 0.0
    %82 = vmatpush1.msra.mxu0 %v49
    %83 = vmatprep.subr.mxu0 0.0
    %84 = vmatpush1.msra.mxu0 %v48
    %85 = vmatprep.subr.mxu0 0.0
    %86 = vmatpush1.msra.mxu0 %v47
    %87 = vmatprep.subr.mxu0 0.0
    %88 = vmatpush1.msra.mxu0 %v46
    %89 = vmatprep.subr.mxu0 0.0
    %90 = vmatpush1.msra.mxu0 %v45
    %91 = vmatprep.subr.mxu0 0.0
    %92 = vmatpush1.msra.mxu0 %v44
    %93 = vmatprep.subr.mxu0 0.0
    %94 = vmatpush1.msra.mxu0 %v43
    %95 = vmatprep.subr.mxu0 0.0
    %96 = vmatpush1.msra.mxu0 %v42
    %97 = vmatprep.subr.mxu0 0.0
    %98 = vmatpush2.msra.mxu0 0.0
    %99 = vmatprep.subr.mxu0 0.0
    %100 = vmatpush2.msra.mxu0 0.0
    %101 = vmatprep.subr.mxu0 0.0
    %102 = vmatpush2.msra.mxu0 0.0
    %103 = vmatprep.subr.mxu0 0.0
    %104 = vmatpush2.msra.mxu0 0.0
    %105 = vmatprep.subr.mxu0 0.0
    %106 = vmatpush2.msra.mxu0 0.0
    %107 = vmatprep.subr.mxu0 0.0
    %108 = vmatpush2.msra.mxu0 0.0
    %109 = vmatprep.subr.mxu0 0.0
    %110 = vmatpush2.msra.mxu0 0.0
    %111 = vmatprep.subr.mxu0 0.0
    %112 = vmatpush2.msra.mxu0 0.0
    %113 = vmatprep.subr.mxu0 0.0
    %114 = vmatpush2.msra.mxu0 0.0
    %115 = vmatprep.subr.mxu0 0.0
    %116 = vmatpush2.msra.mxu0 0.0
    %117 = vmatprep.subr.mxu0 0.0
    %118 = vmatpush2.msra.mxu0 0.0
    %119 = vmatprep.subr.mxu0 0.0
    %120 = vmatpush2.msra.mxu0 0.0
    %121 = vmatprep.subr.mxu0 0.0
    %122 = vmatpush2.msra.mxu0 0.0
    %123 = vmatprep.subr.mxu0 0.0
    %124 = vmatpush2.msra.mxu0 0.0
    %125 = vmatprep.subr.mxu0 0.0
    %126 = vmatpush2.msra.mxu0 0.0
    %127 = vmatprep.subr.mxu0 0.0
    %128 = vmatpush2.msra.mxu0 0.0
    %129 = vmatprep.mubr.f32.mxu0 0.0
    %130 = vmatmul.mubr.f32.gmra.mxu0 %v41
    %v131 = vpop.f32.mrf.mxu0
    %v132 = vadd.f32 %v63, %v131
    %v133 = vpop.f32.mrf.mxu0
    %134 = vdwg.mxu0
    %135 = vst [vmem:[#allocation7] sm:$0xff] %v132
    // Predicated region
    $region22: #{tpu_custom_call.1} parent=1 // pred_check
      _
    $region23: #{tpu_custom_call.1} parent=1 // pred_check_branch
      %137 = sbr.rel (0) target = $region25
    $region24: #{tpu_custom_call.1} parent=1 // pred_region
      %s139 = ssub.s32 128, 128
      %140 = vsyncadd [#allocation4], %s139
      %s142 = sshll.u32 [#allocation7], 4
      %s143 = int_to_ptr.vmem [resolvable:$true] %s142
      %145 = dma.vmem_to_hbm [thread:$0]  %s143, 128, %s3, [#allocation4]
    $region25: #{tpu_custom_call.1} parent=1 // pred_fallthru
      _
    // Predicated region
    $region26: #{tpu_custom_call.1} parent=1 // pred_check
      _
    $region27: #{tpu_custom_call.1} parent=1 // pred_check_branch
      %147 = sbr.rel (0) target = $region29
    $region28: #{tpu_custom_call.1} parent=1 // pred_region
      %148 = dma.done [#allocation4], 128
    $region29: #{tpu_custom_call.1} parent=1 // pred_fallthru
      _
    %149 = vsyncpa [#allocation3], 1
    %150 = vsyncpa [#allocation6], 1
    %151 = vsyncpa [#allocation4], 1

</llo_original>
